<compile_context>
chip_gen: v6e
topology: v6e:2x2x1
jax: 0.10.0
libtpu: 0.0.40
codegen_flags: <defaults>
</compile_context>

<pallas_src>
import functools

import jax
import jax.numpy as jnp
from jax.experimental import pallas as pl
from jax.experimental.pallas import tpu as pltpu


# ----------------------------------------------------------------------------
# Fused Pallas kernel: conv3x3 + ReLU + 1x1 head + sigmoid + MSE partial + mask
# ----------------------------------------------------------------------------
def _fused_conv_head_mse_kernel(
        band_ref,                        # (1, 1, C, (th+4)*W) bf16 flat row band
        gt_ref,                          # (1, K, r)           f32 GT heatmaps
        w1_ref, b1_ref, w2_ref, b2_ref,  # VMEM-resident weights
        hm_ref,                          # (1, K, r)           f32 predicted heatmaps
        mask_ref,                        # (1, K, r)           int8 (gt > 0)
        part_ref,                        # (1, 1, 8, 128)      f32 per-(b,h) sq-err
        *, th, w):
    r = th * w

    # Column index of each flat spatial position (periodic 0..w-1).  The +-1
    # lane-shifted taps wrap across image rows; these 0/1 masks zero the
    # wrapped lanes, reproducing the zero W-halo of a "same" conv without any
    # W padding, junk columns or in-kernel reshapes.
    col = jax.lax.broadcasted_iota(jnp.int32, (1, r), 1) % w
    mask_left = (col != 0).astype(jnp.bfloat16)          # kills x == -1 reads
    mask_right = (col != (w - 1)).astype(jnp.bfloat16)   # kills x ==  W reads

    # Build the (9*C, r) patch from contiguous, statically-offset lane slices
    # of the flat band (tap (dy, dx) is a flat shift of (dy+1)*W + dx - 1),
    # then run ONE fused MXU matmul over all 9 taps.
    slabs = []
    for tap in range(9):
        dy, dxi = divmod(tap, 3)
        start = (dy + 1) * w + (dxi - 1)
        slab = band_ref[0, 0, :, pl.ds(start, r)]        # (C, r) bf16
        if dxi == 0:
            slab = slab * mask_left
        elif dxi == 2:
            slab = slab * mask_right
        slabs.append(slab)
    patch = jnp.concatenate(slabs, axis=0)               # (9C, r) bf16

    # layer 1: 3x3 conv == (HID, 9C) @ (9C, r), f32 accumulate, bias + ReLU.
    hid = jnp.dot(w1_ref[...], patch, preferred_element_type=jnp.float32)
    hid = jnp.maximum(hid + b1_ref[...], 0.0)            # (HID, r) f32

    # layer 2: 1x1 head + sigmoid; hidden activation never leaves VMEM.
    logits = jnp.dot(w2_ref[...], hid.astype(jnp.bfloat16),
                     preferred_element_type=jnp.float32) + b2_ref[...]
    hm = jax.nn.sigmoid(logits)                          # (K, r) f32, lane-dense

    # fused loss / mask epilogue (no second HBM pass over hm).
    gt = gt_ref[0]                                       # (K, r) f32
    hm_ref[0] = hm
    mask_ref[0] = (gt > 0.0).astype(jnp.float32).astype(jnp.int8)
    d = hm - gt
    # Per-(b, h) squared-error partial: no cross-step carry -> both grid axes
    # stay "parallel" (keeps both v7x TensorCores busy even at per-chip B=1).
    part_ref[0, 0] = jnp.full((8, 128), jnp.sum(d * d), jnp.float32)


def _pick_row_tile(H, W, target_lanes=2048):
    """Pick a divisor th of H such that th*W is a multiple of 128 (lane-dense
    blocks), targeting ~2k lanes/step to amortize per-step overhead; falls back
    to th = H (block == full spatial dim, always legal)."""
    best, best_score = H, None
    for th in range(1, H + 1):
        if H % th:
            continue
        r = th * W
        if th != H and r % 128:
            continue
        score = abs(r - target_lanes)
        if best_score is None or score < best_score:
            best, best_score = th, score
    return best


def fused_conv_head_mse(x_nchw, gt_kflat, w1, b1, w2, b2, *, row_tile=None):
    """x_nchw  : (B, C, H, W)  f32 PyTorch NCHW input (layout kept as-is)
       gt_kflat: (B, K, H*W)   f32 GT heatmaps, NCHW-flat (pure reshape)
       returns (hm (B,K,H*W) f32, mask (B,K,H*W) int8, sq_err (B,nh,8,128) f32)"""
    B, C, H, W = x_nchw.shape
    HID = w1.shape[-1]
    K = w2.shape[-1]
    th = _pick_row_tile(H, W) if row_tile is None else row_tile
    assert H % th == 0 and (th == H or (th * W) % 128 == 0), \
        "row tile must divide H and give a 128-multiple lane block"
    nh = H // th
    r = th * W
    band_len = (th + 4) * W

    # Stay NCHW: pad H with 2 zero rows top/bottom (conv halo + flat-shift
    # slack), cast to bf16 (halves the x read stream), flatten the spatial dims.
    x_h = jnp.pad(x_nchw, ((0, 0), (0, 0), (2, 2), (0, 0))).astype(jnp.bfloat16)
    x_flat = x_h.reshape(B, C, (H + 4) * W)
    # One overlapping row band per h-tile so each grid step only DMAs its own
    # band: bounded VMEM per step (fits v7x's 64 MiB at production sizes) and
    # per-step input pipelining instead of a whole-image-per-b block.
    if nh == 1:
        bands = x_flat[:, None]                       # pure reshape, no copy
    else:
        bands = jnp.stack(
            [x_flat[:, :, h * r: h * r + band_len] for h in range(nh)], axis=1)

    # Tiny weight re-layouts (once per call, negligible).
    w1_r = w1.reshape(9 * C, HID).T.astype(jnp.bfloat16)   # (HID, 9C), tap-major cols
    w2_t = w2.T.astype(jnp.bfloat16)                       # (K, HID)
    b1_c = b1.reshape(HID, 1).astype(jnp.float32)
    b2_c = b2.reshape(K, 1).astype(jnp.float32)

    kernel = functools.partial(_fused_conv_head_mse_kernel, th=th, w=W)

    return pl.pallas_call(
        kernel,
        out_shape=(
            jax.ShapeDtypeStruct((B, K, H * W), jnp.float32),    # hm, NCHW-flat
            jax.ShapeDtypeStruct((B, K, H * W), jnp.int8),       # mask = (gt > 0)
            jax.ShapeDtypeStruct((B, nh, 8, 128), jnp.float32),  # sq-err partials
        ),
        grid=(B, nh),
        in_specs=[
            pl.BlockSpec((1, 1, C, band_len), lambda b, h: (b, h, 0, 0)),
            pl.BlockSpec((1, K, r), lambda b, h: (b, 0, h)),
            pl.BlockSpec((HID, 9 * C), lambda b, h: (0, 0)),
            pl.BlockSpec((HID, 1), lambda b, h: (0, 0)),
            pl.BlockSpec((K, HID), lambda b, h: (0, 0)),
            pl.BlockSpec((K, 1), lambda b, h: (0, 0)),
        ],
        out_specs=(
            pl.BlockSpec((1, K, r), lambda b, h: (b, 0, h)),
            pl.BlockSpec((1, K, r), lambda b, h: (b, 0, h)),
            pl.BlockSpec((1, 1, 8, 128), lambda b, h: (b, h, 0, 0)),
        ),
        compiler_params=pltpu.CompilerParams(
            dimension_semantics=("parallel", "parallel"),
            # default scoped VMEM is only 16 MiB on v5e; 32 MiB is safe on all
            # of v5e/v6e (128 MiB physical) and v7x (64 MiB physical).
            vmem_limit_bytes=32 * 1024 * 1024,
        ),
    )(bands, gt_kflat, w1_r, b1_c, w2_t, b2_c)


# ----------------------------------------------------------------------------
# Pure-JAX f32 reference (validation only)
# ----------------------------------------------------------------------------
def _reference_forward(x, gt, w1, b1, w2, b2):
    B, C, H, W = x.shape
    hi = jax.lax.Precision.HIGHEST
    xp = jnp.pad(x, ((0, 0), (0, 0), (1, 1), (1, 1)))
    acc = jnp.zeros((B, w1.shape[-1], H, W), jnp.float32)
    for tap in range(9):
        dy, dx = divmod(tap, 3)
        acc = acc + jnp.einsum('bchw,cf->bfhw', xp[:, :, dy:dy + H, dx:dx + W],
                               w1[tap], precision=hi)
    hid = jax.nn.relu(acc + b1[None, :, None, None])
    hm = jax.nn.sigmoid(jnp.einsum('bfhw,fk->bkhw', hid, w2, precision=hi)
                        + b2[None, :, None, None])
    loss = jnp.mean((hm - gt) ** 2)
    return hm, loss


# ----------------------------------------------------------------------------
# Synthetic "model" + "loss" + ModleWithLoss equivalent
# ----------------------------------------------------------------------------
class SyntheticModel:
    """3x3 conv -> ReLU -> 1x1 conv -> sigmoid heatmaps; passes `ind` through."""

    def __init__(self, c_in, hidden, k_out, key, row_tile=None):
        k1, k2 = jax.random.split(key)
        self.w1 = jax.random.normal(k1, (9, c_in, hidden), jnp.float32) * 0.05
        self.b1 = jnp.zeros((hidden,), jnp.float32)
        self.w2 = jax.random.normal(k2, (hidden, k_out), jnp.float32) * 0.05
        self.b2 = jnp.zeros((k_out,), jnp.float32)
        self.k_out = k_out
        self.row_tile = row_tile

    def __call__(self, x_nchw, heatmaps, ind):
        B, C, H, W = x_nchw.shape
        K = self.k_out
        if heatmaps is not None:
            gt_kflat = heatmaps.reshape(B, K, H * W)      # pure reshape, no transpose
        else:
            # TODO(synk): val/test could use a loss-free kernel variant instead
            # of computing squared error against zeros.
            gt_kflat = jnp.zeros((B, K, H * W), jnp.float32)

        hm_kflat, mask_kflat, sq_parts = fused_conv_head_mse(
            x_nchw, gt_kflat, self.w1, self.b1, self.w2, self.b2,
            row_tile=self.row_tile)

        outputs = {"hm": hm_kflat.reshape(B, K, H, W)}    # pure reshape, stays NCHW
        if heatmaps is not None:
            outputs["_sq_err_parts"] = sq_parts           # (B, nh, 8, 128)
            outputs["_mask"] = mask_kflat.reshape(B, K, H, W)   # int8 0/1
        if ind is not None:
            feat = jnp.take_along_axis(hm_kflat, ind[:, None, :], axis=2)  # (B,K,N)
            outputs["hm_feat"] = jnp.transpose(feat, (0, 2, 1))            # (B,N,K)
        return outputs, ind


class SyntheticLoss:
    """MSE heatmap loss; returns (loss, loss_stats, rendered, masks).
       The heavy work already happened inside the fused Pallas kernel; this
       only normalizes the per-tile partial sums."""

    def __call__(self, outputs, mode, batch):
        gt = batch["heatmaps"]                            # (B, K, H, W)
        B, K, H, W = gt.shape
        loss = jnp.sum(outputs["_sq_err_parts"][..., 0, 0]) / float(B * K * H * W)
        masks = outputs["_mask"]                          # (B, K, H, W) int8 0/1
        rendered = outputs["hm"]
        return loss, {"loss": loss, "hm_loss": loss}, rendered, masks

    # TODO(synk): InterHandNew-specific mesh/vertex loss not specified; reuse MSE path.
    def interhandforward(self, outputs, mode, batch):
        return self(outputs, mode, batch)


class Opt:
    dataset = "coco"


class ModelWithLoss:
    """JAX/Pallas equivalent of lib/trains/base_trainer.ModleWithLoss."""

    def __init__(self, model, loss, opt):
        self.model = model
        self.loss = loss
        self.opt = opt

    def forward(self, batch, mode):
        if mode == "train":
            tmp_heatmaps = batch["heatmaps"] if "heatmaps" in batch else None
            outputs, ind = self.model(batch["input"], tmp_heatmaps, batch["ind"])
            if self.opt.dataset == "InterHandNew":
                loss, loss_stats, rendered, masks = self.loss.interhandforward(
                    outputs, mode, batch)
            else:
                loss, loss_stats, rendered, masks = self.loss(outputs, mode, batch)
            return outputs, loss, loss_stats, rendered, masks
        elif mode in ("val", "test"):
            outputs, ind = self.model(batch["input"], None, None)
            # TODO(synk): val/test path needs the loss module's mesh-regression
            # internals (vertex/joint/lms21/handness heads), which are not given.
            return (None, None, None, None, None, None)


# ----------------------------------------------------------------------------
if __name__ == "__main__":
    B, C_IN, H, W = 2, 4, 16, 16
    HIDDEN, K_OUT, N_OBJ = 32, 4, 8

    key = jax.random.PRNGKey(0)
    k_in, k_hm, k_ind, k_model = jax.random.split(key, 4)

    batch = {
        "input": jax.random.normal(k_in, (B, C_IN, H, W), jnp.float32),
        "heatmaps": (jax.random.uniform(k_hm, (B, K_OUT, H, W)) > 0.7
                     ).astype(jnp.float32),
        "ind": jax.random.randint(k_ind, (B, N_OBJ), 0, H * W, jnp.int32),
    }

    model = SyntheticModel(C_IN, HIDDEN, K_OUT, k_model)
    module = ModelWithLoss(model, SyntheticLoss(), Opt())

    outputs, loss, loss_stats, rendered, masks = module.forward(batch, "train")
    jax.block_until_ready((outputs["hm"], loss, rendered, masks))

    # shape / sanity checks
    assert outputs["hm"].shape == (B, K_OUT, H, W)
    assert outputs["hm_feat"].shape == (B, N_OBJ, K_OUT)
    assert rendered.shape == (B, K_OUT, H, W)
    assert masks.shape == (B, K_OUT, H, W)
    assert loss.shape == ()
    assert bool(jnp.isfinite(loss))

    # numerical check vs pure-JAX f32 reference (kernel uses a bf16 matmul path)
    hm_ref, loss_ref = _reference_forward(batch["input"], batch["heatmaps"],
                                          model.w1, model.b1, model.w2, model.b2)
    assert float(jnp.max(jnp.abs(outputs["hm"] - hm_ref))) < 2e-2
    assert abs(float(loss) - float(loss_ref)) < 5e-3
    assert bool(jnp.all((masks > 0) == (batch["heatmaps"] > 0)))

    # multi-row-tile path (nh > 1): same weights, row_tile=8 -> grid (B, 2)
    model2 = SyntheticModel(C_IN, HIDDEN, K_OUT, k_model, row_tile=8)
    out2, _ = model2(batch["input"], batch["heatmaps"], batch["ind"])
    loss2 = jnp.sum(out2["_sq_err_parts"][..., 0, 0]) / float(B * K_OUT * H * W)
    jax.block_until_ready((out2["hm"], loss2))
    assert float(jnp.max(jnp.abs(out2["hm"] - outputs["hm"]))) < 1e-5
    assert abs(float(loss2) - float(loss)) < 1e-4

    print("KERNEL_OK")
</pallas_src>

<mosaic_0001>
module attributes {stable_mosaic.version = 11 : i64} {
  func.func @_fused_conv_head_mse_kernel(%arg0: i32, %arg1: i32, %arg2: memref<1x1x4x320xbf16, #tpu.memory_space<vmem>>, %arg3: memref<1x4x256xf32, #tpu.memory_space<vmem>>, %arg4: memref<32x36xbf16, #tpu.memory_space<vmem>>, %arg5: memref<32x1xf32, #tpu.memory_space<vmem>>, %arg6: memref<4x32xbf16, #tpu.memory_space<vmem>>, %arg7: memref<4x1xf32, #tpu.memory_space<vmem>>, %arg8: memref<1x4x256xf32, #tpu.memory_space<vmem>>, %arg9: memref<1x4x256xi8, #tpu.memory_space<vmem>>, %arg10: memref<1x1x8x128xf32, #tpu.memory_space<vmem>>) attributes {dimension_semantics = [#tpu.dimension_semantics<parallel>, #tpu.dimension_semantics<parallel>], iteration_bounds = array<i64: 2, 1>, scalar_prefetch = 0 : i64, scratch_operands = 0 : i64, tpu.core_type = #tpu.core_type<tc>, window_params = [{transform_indices = @transform_0, window_bounds = array<i64: 1, 1, 4, 320>}, {transform_indices = @transform_1, window_bounds = array<i64: 1, 4, 256>}, {pipeline_mode = #tpu.pipeline_mode<synchronous>, transform_indices = @transform_2, window_bounds = array<i64: 32, 36>}, {pipeline_mode = #tpu.pipeline_mode<synchronous>, transform_indices = @transform_3, window_bounds = array<i64: 32, 1>}, {pipeline_mode = #tpu.pipeline_mode<synchronous>, transform_indices = @transform_4, window_bounds = array<i64: 4, 32>}, {pipeline_mode = #tpu.pipeline_mode<synchronous>, transform_indices = @transform_5, window_bounds = array<i64: 4, 1>}, {transform_indices = @transform_6, window_bounds = array<i64: 1, 4, 256>}, {transform_indices = @transform_7, window_bounds = array<i64: 1, 4, 256>}, {transform_indices = @transform_8, window_bounds = array<i64: 1, 1, 8, 128>}]} {
    %0 = tpu.iota {dimensions = array<i32: 1>} : vector<1x256xi32>
    %c16_i32 = arith.constant 16 : i32
    %c0_i32 = arith.constant 0 : i32
    %1 = arith.cmpi eq, %c16_i32, %c0_i32 : i32
    %c1_i32 = arith.constant 1 : i32
    %2 = arith.select %1, %c1_i32, %c16_i32 : i32
    %3 = vector.broadcast %2 : i32 to vector<1x256xi32>
    %4 = arith.remsi %0, %3 : vector<1x256xi32>
    %c0_i32_0 = arith.constant 0 : i32
    %5 = vector.broadcast %c0_i32_0 : i32 to vector<1x256xi32>
    %6 = arith.cmpi ne, %4, %5 : vector<1x256xi32>
    %c0_i32_1 = arith.constant 0 : i32
    %7 = vector.broadcast %c0_i32_1 : i32 to vector<1x256xi32>
    %8 = arith.cmpi slt, %4, %7 : vector<1x256xi32>
    %c0_i32_2 = arith.constant 0 : i32
    %9 = arith.cmpi slt, %2, %c0_i32_2 : i32
    %10 = vector.broadcast %9 : i1 to vector<1x256xi1>
    %11 = vector.broadcast %10 : vector<1x256xi1> to vector<1x256xi1>
    %12 = arith.xori %8, %11 : vector<1x256xi1>
    %13 = arith.andi %12, %6 : vector<1x256xi1>
    %14 = vector.broadcast %2 : i32 to vector<1x256xi32>
    %15 = arith.addi %4, %14 : vector<1x256xi32>
    %16 = arith.select %13, %15, %4 : vector<1x256xi1>, vector<1x256xi32>
    %c0_i32_3 = arith.constant 0 : i32
    %17 = vector.broadcast %c0_i32_3 : i32 to vector<1x256xi32>
    %18 = arith.cmpi ne, %16, %17 : vector<1x256xi32>
    %19 = arith.extui %18 : vector<1x256xi1> to vector<1x256xi32>
    %20 = arith.sitofp %19 : vector<1x256xi32> to vector<1x256xf32>
    %21 = arith.truncf %20 : vector<1x256xf32> to vector<1x256xbf16>
    %c15_i32 = arith.constant 15 : i32
    %22 = vector.broadcast %c15_i32 : i32 to vector<1x256xi32>
    %23 = arith.cmpi ne, %16, %22 : vector<1x256xi32>
    %24 = arith.extui %23 : vector<1x256xi1> to vector<1x256xi32>
    %25 = arith.sitofp %24 : vector<1x256xi32> to vector<1x256xf32>
    %26 = arith.truncf %25 : vector<1x256xf32> to vector<1x256xbf16>
    %c0 = arith.constant 0 : index
    %c0_4 = arith.constant 0 : index
    %c0_5 = arith.constant 0 : index
    %c15 = arith.constant 15 : index
    %27 = vector.load %arg2[%c0, %c0_4, %c0_5, %c15] : memref<1x1x4x320xbf16, #tpu.memory_space<vmem>>, vector<1x1x4x256xbf16>
    %28 = vector.shape_cast %27 : vector<1x1x4x256xbf16> to vector<4x256xbf16>
    %29 = vector.broadcast %21 : vector<1x256xbf16> to vector<4x256xbf16>
    %30 = arith.mulf %28, %29 : vector<4x256xbf16>
    %c0_6 = arith.constant 0 : index
    %c0_7 = arith.constant 0 : index
    %c0_8 = arith.constant 0 : index
    %c16 = arith.constant 16 : index
    %31 = vector.load %arg2[%c0_6, %c0_7, %c0_8, %c16] : memref<1x1x4x320xbf16, #tpu.memory_space<vmem>>, vector<1x1x4x256xbf16>
    %32 = vector.shape_cast %31 : vector<1x1x4x256xbf16> to vector<4x256xbf16>
    %c0_9 = arith.constant 0 : index
    %c0_10 = arith.constant 0 : index
    %c0_11 = arith.constant 0 : index
    %c17 = arith.constant 17 : index
    %33 = vector.load %arg2[%c0_9, %c0_10, %c0_11, %c17] : memref<1x1x4x320xbf16, #tpu.memory_space<vmem>>, vector<1x1x4x256xbf16>
    %34 = vector.shape_cast %33 : vector<1x1x4x256xbf16> to vector<4x256xbf16>
    %35 = vector.broadcast %26 : vector<1x256xbf16> to vector<4x256xbf16>
    %36 = arith.mulf %34, %35 : vector<4x256xbf16>
    %c0_12 = arith.constant 0 : index
    %c0_13 = arith.constant 0 : index
    %c0_14 = arith.constant 0 : index
    %c31 = arith.constant 31 : index
    %37 = vector.load %arg2[%c0_12, %c0_13, %c0_14, %c31] : memref<1x1x4x320xbf16, #tpu.memory_space<vmem>>, vector<1x1x4x256xbf16>
    %38 = vector.shape_cast %37 : vector<1x1x4x256xbf16> to vector<4x256xbf16>
    %39 = vector.broadcast %21 : vector<1x256xbf16> to vector<4x256xbf16>
    %40 = arith.mulf %38, %39 : vector<4x256xbf16>
    %c0_15 = arith.constant 0 : index
    %c0_16 = arith.constant 0 : index
    %c0_17 = arith.constant 0 : index
    %c32 = arith.constant 32 : index
    %41 = vector.load %arg2[%c0_15, %c0_16, %c0_17, %c32] : memref<1x1x4x320xbf16, #tpu.memory_space<vmem>>, vector<1x1x4x256xbf16>
    %42 = vector.shape_cast %41 : vector<1x1x4x256xbf16> to vector<4x256xbf16>
    %c0_18 = arith.constant 0 : index
    %c0_19 = arith.constant 0 : index
    %c0_20 = arith.constant 0 : index
    %c33 = arith.constant 33 : index
    %43 = vector.load %arg2[%c0_18, %c0_19, %c0_20, %c33] : memref<1x1x4x320xbf16, #tpu.memory_space<vmem>>, vector<1x1x4x256xbf16>
    %44 = vector.shape_cast %43 : vector<1x1x4x256xbf16> to vector<4x256xbf16>
    %45 = vector.broadcast %26 : vector<1x256xbf16> to vector<4x256xbf16>
    %46 = arith.mulf %44, %45 : vector<4x256xbf16>
    %c0_21 = arith.constant 0 : index
    %c0_22 = arith.constant 0 : index
    %c0_23 = arith.constant 0 : index
    %c47 = arith.constant 47 : index
    %47 = vector.load %arg2[%c0_21, %c0_22, %c0_23, %c47] : memref<1x1x4x320xbf16, #tpu.memory_space<vmem>>, vector<1x1x4x256xbf16>
    %48 = vector.shape_cast %47 : vector<1x1x4x256xbf16> to vector<4x256xbf16>
    %49 = vector.broadcast %21 : vector<1x256xbf16> to vector<4x256xbf16>
    %50 = arith.mulf %48, %49 : vector<4x256xbf16>
    %c0_24 = arith.constant 0 : index
    %c0_25 = arith.constant 0 : index
    %c0_26 = arith.constant 0 : index
    %c48 = arith.constant 48 : index
    %51 = vector.load %arg2[%c0_24, %c0_25, %c0_26, %c48] : memref<1x1x4x320xbf16, #tpu.memory_space<vmem>>, vector<1x1x4x256xbf16>
    %52 = vector.shape_cast %51 : vector<1x1x4x256xbf16> to vector<4x256xbf16>
    %c0_27 = arith.constant 0 : index
    %c0_28 = arith.constant 0 : index
    %c0_29 = arith.constant 0 : index
    %c49 = arith.constant 49 : index
    %53 = vector.load %arg2[%c0_27, %c0_28, %c0_29, %c49] : memref<1x1x4x320xbf16, #tpu.memory_space<vmem>>, vector<1x1x4x256xbf16>
    %54 = vector.shape_cast %53 : vector<1x1x4x256xbf16> to vector<4x256xbf16>
    %55 = vector.broadcast %26 : vector<1x256xbf16> to vector<4x256xbf16>
    %56 = arith.mulf %54, %55 : vector<4x256xbf16>
    %57 = tpu.concatenate %30, %32, %36, %40, %42, %46, %50, %52, %56 in 0 : vector<4x256xbf16>, vector<4x256xbf16>, vector<4x256xbf16>, vector<4x256xbf16>, vector<4x256xbf16>, vector<4x256xbf16>, vector<4x256xbf16>, vector<4x256xbf16>, vector<4x256xbf16> -> vector<36x256xbf16>
    %c0_30 = arith.constant 0 : index
    %c0_31 = arith.constant 0 : index
    %58 = vector.load %arg4[%c0_30, %c0_31] : memref<32x36xbf16, #tpu.memory_space<vmem>>, vector<32x36xbf16>
    %cst = arith.constant dense<0.000000e+00> : vector<32x256xf32>
    %59 = tpu.matmul %58, %57, %cst {dimension_numbers = #tpu.dot_dimension_numbers<[1], [0], [0], [1], [0, 0, 1, 1], [], []>} : vector<32x36xbf16>, vector<36x256xbf16>, vector<32x256xf32> -> vector<32x256xf32>
    %c0_32 = arith.constant 0 : index
    %c0_33 = arith.constant 0 : index
    %60 = vector.load %arg5[%c0_32, %c0_33] : memref<32x1xf32, #tpu.memory_space<vmem>>, vector<32x1xf32>
    %61 = vector.broadcast %60 : vector<32x1xf32> to vector<32x256xf32>
    %62 = arith.addf %59, %61 : vector<32x256xf32>
    %cst_34 = arith.constant 0.000000e+00 : f32
    %63 = vector.broadcast %cst_34 : f32 to vector<32x256xf32>
    %64 = arith.maximumf %62, %63 : vector<32x256xf32>
    %c0_35 = arith.constant 0 : index
    %c0_36 = arith.constant 0 : index
    %65 = vector.load %arg6[%c0_35, %c0_36] : memref<4x32xbf16, #tpu.memory_space<vmem>>, vector<4x32xbf16>
    %66 = arith.truncf %64 : vector<32x256xf32> to vector<32x256xbf16>
    %cst_37 = arith.constant dense<0.000000e+00> : vector<4x256xf32>
    %67 = tpu.matmul %65, %66, %cst_37 {dimension_numbers = #tpu.dot_dimension_numbers<[1], [0], [0], [1], [0, 0, 1, 1], [], []>} : vector<4x32xbf16>, vector<32x256xbf16>, vector<4x256xf32> -> vector<4x256xf32>
    %c0_38 = arith.constant 0 : index
    %c0_39 = arith.constant 0 : index
    %68 = vector.load %arg7[%c0_38, %c0_39] : memref<4x1xf32, #tpu.memory_space<vmem>>, vector<4x1xf32>
    %69 = vector.broadcast %68 : vector<4x1xf32> to vector<4x256xf32>
    %70 = arith.addf %67, %69 : vector<4x256xf32>
    %71 = arith.negf %70 : vector<4x256xf32>
    %72 = math.exp %71 : vector<4x256xf32>
    %cst_40 = arith.constant 1.000000e+00 : f32
    %73 = vector.broadcast %cst_40 : f32 to vector<4x256xf32>
    %74 = arith.addf %73, %72 : vector<4x256xf32>
    %75 = arith.divf %73, %74 : vector<4x256xf32>
    %c0_41 = arith.constant 0 : index
    %c0_42 = arith.constant 0 : index
    %c0_43 = arith.constant 0 : index
    %76 = vector.load %arg3[%c0_41, %c0_42, %c0_43] : memref<1x4x256xf32, #tpu.memory_space<vmem>>, vector<1x4x256xf32>
    %77 = vector.shape_cast %76 : vector<1x4x256xf32> to vector<4x256xf32>
    %c0_44 = arith.constant 0 : index
    %c0_45 = arith.constant 0 : index
    %c0_46 = arith.constant 0 : index
    %78 = vector.load %arg8[%c0_44, %c0_45, %c0_46] : memref<1x4x256xf32, #tpu.memory_space<vmem>>, vector<1x4x256xf32>
    %79 = vector.shape_cast %78 : vector<1x4x256xf32> to vector<4x256xf32>
    %80 = vector.shape_cast %75 : vector<4x256xf32> to vector<1x4x256xf32>
    tpu.vector_store %arg8[%c0_44, %c0_45, %c0_46], %80 {strides = array<i32>} : memref<1x4x256xf32, #tpu.memory_space<vmem>>, vector<1x4x256xf32>,
    %cst_47 = arith.constant 0.000000e+00 : f32
    %81 = vector.broadcast %cst_47 : f32 to vector<4x256xf32>
    %82 = arith.cmpf ogt, %77, %81 : vector<4x256xf32>
    %83 = arith.extui %82 : vector<4x256xi1> to vector<4x256xi32>
    %84 = arith.sitofp %83 : vector<4x256xi32> to vector<4x256xf32>
    %85 = arith.fptosi %84 : vector<4x256xf32> to vector<4x256xi8>
    %c0_48 = arith.constant 0 : index
    %c0_49 = arith.constant 0 : index
    %c0_50 = arith.constant 0 : index
    %86 = vector.load %arg9[%c0_48, %c0_49, %c0_50] : memref<1x4x256xi8, #tpu.memory_space<vmem>>, vector<1x4x256xi8>
    %87 = vector.shape_cast %86 : vector<1x4x256xi8> to vector<4x256xi8>
    %88 = vector.shape_cast %85 : vector<4x256xi8> to vector<1x4x256xi8>
    tpu.vector_store %arg9[%c0_48, %c0_49, %c0_50], %88 {strides = array<i32>} : memref<1x4x256xi8, #tpu.memory_space<vmem>>, vector<1x4x256xi8>,
    %89 = arith.subf %75, %77 : vector<4x256xf32>
    %90 = arith.mulf %89, %89 : vector<4x256xf32>
    %91 = vector.shape_cast %90 : vector<4x256xf32> to vector<1x4x256xf32>
    %cst_51 = arith.constant dense<0.000000e+00> : vector<1xf32>
    %92 = vector.multi_reduction <add>, %91, %cst_51 [1, 2] : vector<1x4x256xf32> to vector<1xf32>
    %93 = vector.shape_cast %92 : vector<1xf32> to vector<1x1x1xf32>
    %94 = vector.extract %93[0, 0, 0] : f32 from vector<1x1x1xf32>
    %95 = vector.broadcast %94 : f32 to vector<8x128xf32>
    %c0_52 = arith.constant 0 : index
    %c0_53 = arith.constant 0 : index
    %c0_54 = arith.constant 0 : index
    %c0_55 = arith.constant 0 : index
    %96 = vector.load %arg10[%c0_52, %c0_53, %c0_54, %c0_55] : memref<1x1x8x128xf32, #tpu.memory_space<vmem>>, vector<1x1x8x128xf32>
    %97 = vector.shape_cast %96 : vector<1x1x8x128xf32> to vector<8x128xf32>
    %98 = vector.shape_cast %95 : vector<8x128xf32> to vector<1x1x8x128xf32>
    tpu.vector_store %arg10[%c0_52, %c0_53, %c0_54, %c0_55], %98 {strides = array<i32>} : memref<1x1x8x128xf32, #tpu.memory_space<vmem>>, vector<1x1x8x128xf32>,
    return
  }
  func.func @transform_0(%arg0: i32, %arg1: i32) -> (i32, i32, i32, i32) {
    %c0_i32 = arith.constant 0 : i32
    %c0_i32_0 = arith.constant 0 : i32
    %c0_i32_1 = arith.constant 0 : i32
    return %arg0, %arg1, %c0_i32, %c0_i32_0 : i32, i32, i32, i32
  }
  func.func @transform_1(%arg0: i32, %arg1: i32) -> (i32, i32, i32) {
    %c0_i32 = arith.constant 0 : i32
    %c0_i32_0 = arith.constant 0 : i32
    return %arg0, %c0_i32, %arg1 : i32, i32, i32
  }
  func.func @transform_2(%arg0: i32, %arg1: i32) -> (i32, i32) {
    %c0_i32 = arith.constant 0 : i32
    %c0_i32_0 = arith.constant 0 : i32
    %c0_i32_1 = arith.constant 0 : i32
    return %c0_i32, %c0_i32_0 : i32, i32
  }
  func.func @transform_3(%arg0: i32, %arg1: i32) -> (i32, i32) {
    %c0_i32 = arith.constant 0 : i32
    %c0_i32_0 = arith.constant 0 : i32
    %c0_i32_1 = arith.constant 0 : i32
    return %c0_i32, %c0_i32_0 : i32, i32
  }
  func.func @transform_4(%arg0: i32, %arg1: i32) -> (i32, i32) {
    %c0_i32 = arith.constant 0 : i32
    %c0_i32_0 = arith.constant 0 : i32
    %c0_i32_1 = arith.constant 0 : i32
    return %c0_i32, %c0_i32_0 : i32, i32
  }
  func.func @transform_5(%arg0: i32, %arg1: i32) -> (i32, i32) {
    %c0_i32 = arith.constant 0 : i32
    %c0_i32_0 = arith.constant 0 : i32
    %c0_i32_1 = arith.constant 0 : i32
    return %c0_i32, %c0_i32_0 : i32, i32
  }
  func.func @transform_6(%arg0: i32, %arg1: i32) -> (i32, i32, i32) {
    %c0_i32 = arith.constant 0 : i32
    %c0_i32_0 = arith.constant 0 : i32
    return %arg0, %c0_i32, %arg1 : i32, i32, i32
  }
  func.func @transform_7(%arg0: i32, %arg1: i32) -> (i32, i32, i32) {
    %c0_i32 = arith.constant 0 : i32
    %c0_i32_0 = arith.constant 0 : i32
    return %arg0, %c0_i32, %arg1 : i32, i32, i32
  }
  func.func @transform_8(%arg0: i32, %arg1: i32) -> (i32, i32, i32, i32) {
    %c0_i32 = arith.constant 0 : i32
    %c0_i32_0 = arith.constant 0 : i32
    %c0_i32_1 = arith.constant 0 : i32
    return %arg0, %arg1, %c0_i32, %c0_i32_0 : i32, i32, i32, i32
  }
}

</mosaic_0001>

<llo_original>
// kernel: tpu_custom_call.1
$region0: #{tpu_custom_call.1}
  #allocation0 [shape = 'u32[]', space=smem, size = 0x4, offset = 0x4, fixed_abs, tag = 'smem constant byte address 0x4 - core index']
  #allocation1 [shape = 'u32[144,128]{1,0:T(1,128)}', space=vmem, size = 0x12000, scoped, tag = 'internal scratch']
  %s0 = inlined_call_operand.hbm [shape: bf16[2,1,4,320], index: 0, kind: input, shape index: {}]
  %s1 = inlined_call_operand.vmem [shape: f32[2,4,256], index: 1, kind: input, shape index: {}]
  %s2 = inlined_call_operand.vmem [shape: bf16[32,36], index: 2, kind: input, shape index: {}]
  %s3 = inlined_call_operand.vmem [shape: f32[32,1], index: 3, kind: input, shape index: {}]
  %s4 = inlined_call_operand.vmem [shape: bf16[4,32], index: 4, kind: input, shape index: {}]
  %s5 = inlined_call_operand.vmem [shape: f32[4,1], index: 5, kind: input, shape index: {}]
  %s6 = inlined_call_operand.hbm [shape: f32[2,4,256], index: 6, kind: output, shape index: {0}]
  %s7 = inlined_call_operand.hbm [shape: s8[2,4,256], index: 7, kind: output, shape index: {1}]
  %s8 = inlined_call_operand.hbm [shape: f32[2,1,8,128], index: 8, kind: output, shape index: {2}]
  %9 = xla_tuple %s6, %s7, %s8
  %s10 = sld [smem:[#allocation0]]
  $region77: #{tpu_custom_call.1} parent=0
    _
  %s12 = ssub.s32 1, %s10
  %s13 = scalar_select 0, %s12, %s10
  $region1: #{tpu_custom_call.1} parent=0
    #allocation2 [shape = 'u8[6144]{0}', space=vmem, size = 0x1800, scoped, tag = 'input window, operand 0']
    #allocation3 [shape = 's32[2]{0}', space=sflag, size = 0x8, scoped, tag = 'scoped memory for tpu_custom_call.1']
    #allocation4 [shape = 's32[2]{0}', space=sflag, size = 0x8, scoped, tag = 'scoped memory for tpu_custom_call.1']
    #allocation5 [shape = 'u8[8192]{0}', space=vmem, size = 0x2000, scoped, tag = 'output window, operand 0']
    #allocation6 [shape = 'u8[2048]{0}', space=vmem, size = 0x800, scoped, tag = 'output window, operand 1']
    #allocation7 [shape = 's32[2]{0}', space=sflag, size = 0x8, scoped, tag = 'scoped memory for tpu_custom_call.1']
    #allocation8 [shape = 'u8[8192]{0}', space=vmem, size = 0x2000, scoped, tag = 'output window, operand 2']
    %14 = vsyncpa [#allocation3], 0
    %s15 = scalar_lea.sflag [#allocation3], 1
    %16 = vsyncpa %s15, 0
    %17 = vsyncpa [#allocation4], 0
    %s18 = scalar_lea.sflag [#allocation4], 1
    %19 = vsyncpa %s18, 0
    %20 = vsyncpa [#allocation7], 0
    %s21 = scalar_lea.sflag [#allocation7], 1
    %22 = vsyncpa %s21, 0
    loop: start=0, step=1, limit=4
    $region2: #{tpu_custom_call.1} parent=1 // loop_pre_header
      _
    $region3: #{tpu_custom_call.1} parent=1 // loop_header
      %s24 = sphi 0, %s28
      %p25 = scmp.ge.s32.totalorder %s24, 4
      %s31 = sphi 0, %s43
      %s32 = sphi 0, %s39
      %s33 = sphi 0, %s31
      %s34 = sphi 0, %s32
      %s35 = sphi 0, %s33
      %s36 = sphi 0, %s34
      %s48 = sphi 0, %s50
      %s51 = sphi 0, %s48
      %s52 = sphi 0, %s51
      %s68 = sphi 0, %s52
      %s76 = sphi 0, %s78
      %s79 = sphi 0, %s76
      %s80 = sphi 0, %s79
      %s96 = sphi 0, %s80
      %s100 = sphi 0, %s100
      %s102 = sphi 0, %s100
      %s103 = sphi 0, %s102
      %s117 = sphi 0, %s103
      %s121 = sphi 0, %s121
      %s123 = sphi 0, %s121
      %s124 = sphi 0, %s123
      %s138 = sphi 0, %s124
      %s142 = sphi 0, %s142
      %s144 = sphi 0, %s142
      %s145 = sphi 0, %s144
      %s159 = sphi 0, %s145
      %s163 = sphi 0, %s163
      %s165 = sphi 0, %s163
      %s166 = sphi 0, %s165
      %s180 = sphi 0, %s166
      %s188 = sphi 0, %s190
      %s191 = sphi 0, %s188
      %s192 = sphi 0, %s191
      %s208 = sphi 0, %s192
      %s216 = sphi 0, %s218
      %s219 = sphi 0, %s216
      %s220 = sphi 0, %s219
      %s236 = sphi 0, %s220
      %s244 = sphi 0, %s246
      %s247 = sphi 0, %s244
      %s248 = sphi 0, %s247
      %s264 = sphi 0, %s248
    $region4: #{tpu_custom_call.1} parent=1 // loop_header_branch
      %27 = sbr.rel (%p25) target = $region8
    $region5: #{tpu_custom_call.1} parent=1 // loop_body
      %s29 = ssub.s32 %s24, 1
      %s30 = ssub.s32 %s24, 2
      %s37 = sadd.s32 1, %s32
      %p38 = scmp.ge.s32.totalorder %s37, 1
      %s39 = scalar_select %p38, 0, %s37
      %s40 = sadd.s32 1, %s31
      %s41 = scalar_select %p38, %s40, %s31
      %p42 = scmp.ge.s32.totalorder %s41, 2
      %s43 = scalar_select %p42, 0, %s41
      %s44 = ssub.s32 %s31, %s43
      %s45 = ssub.s32 %s32, %s39
      %s46 = sor.u32 %s44, %s45
      %p47 = scmp.eq.s32.totalorder %s46, 0
      %s49 = sadd.s32 %s48, 1
      %s50 = scalar_select %p47, %s48, %s49
      %p53 = pneg %p47
      %p54 = scmp.eq.s32.totalorder %s24, 1
      %p55 = por %p53, %p54
      %p56 = scmp.ne.s32.totalorder %s48, %s51
      %p57 = scmp.eq.s32.totalorder %s24, 0
      %p58 = por %p56, %p57
      %p59 = scmp.ne.s32.totalorder %s48, %s51
      %p60 = scmp.eq.s32.totalorder %s29, 1
      %p61 = por %p59, %p60
      %p62 = scmp.ne.s32.totalorder %s51, %s52
      %p63 = scmp.eq.s32.totalorder %s29, 0
      %p64 = por %p62, %p63
      %p65 = scmp.ne.s32.totalorder %s51, %s52
      %p66 = scmp.eq.s32.totalorder %s30, 1
      %p67 = por %p65, %p66
      %p69 = scmp.ne.s32.totalorder %s52, %s68
      %p70 = scmp.eq.s32.totalorder %s30, 0
      %p71 = por %p69, %p70
      %s72 = ssub.s32 %s31, %s43
      %s73 = ssub.s32 %s32, %s39
      %s74 = sor.u32 %s72, %s73
      %p75 = scmp.eq.s32.totalorder %s74, 0
      %s77 = sadd.s32 %s76, 1
      %s78 = scalar_select %p75, %s76, %s77
      %p81 = pneg %p75
      %p82 = scmp.eq.s32.totalorder %s24, 1
      %p83 = por %p81, %p82
      %p84 = scmp.ne.s32.totalorder %s76, %s79
      %p85 = scmp.eq.s32.totalorder %s24, 0
      %p86 = por %p84, %p85
      %p87 = scmp.ne.s32.totalorder %s76, %s79
      %p88 = scmp.eq.s32.totalorder %s29, 1
      %p89 = por %p87, %p88
      %p90 = scmp.ne.s32.totalorder %s79, %s80
      %p91 = scmp.eq.s32.totalorder %s29, 0
      %p92 = por %p90, %p91
      %p93 = scmp.ne.s32.totalorder %s79, %s80
      %p94 = scmp.eq.s32.totalorder %s30, 1
      %p95 = por %p93, %p94
      %p97 = scmp.ne.s32.totalorder %s80, %s96
      %p98 = scmp.eq.s32.totalorder %s30, 0
      %p99 = por %p97, %p98
      %s101 = sadd.s32 %s100, 1
      %p104 = scmp.eq.s32.totalorder %s24, 1
      %p105 = scmp.ne.s32.totalorder %s100, %s102
      %p106 = scmp.eq.s32.totalorder %s24, 0
      %p107 = por %p105, %p106
      %p108 = scmp.ne.s32.totalorder %s100, %s102
      %p109 = scmp.eq.s32.totalorder %s29, 1
      %p110 = por %p108, %p109
      %p111 = scmp.ne.s32.totalorder %s102, %s103
      %p112 = scmp.eq.s32.totalorder %s29, 0
      %p113 = por %p111, %p112
      %p114 = scmp.ne.s32.totalorder %s102, %s103
      %p115 = scmp.eq.s32.totalorder %s30, 1
      %p116 = por %p114, %p115
      %p118 = scmp.ne.s32.totalorder %s103, %s117
      %p119 = scmp.eq.s32.totalorder %s30, 0
      %p120 = por %p118, %p119
      %s122 = sadd.s32 %s121, 1
      %p125 = scmp.eq.s32.totalorder %s24, 1
      %p126 = scmp.ne.s32.totalorder %s121, %s123
      %p127 = scmp.eq.s32.totalorder %s24, 0
      %p128 = por %p126, %p127
      %p129 = scmp.ne.s32.totalorder %s121, %s123
      %p130 = scmp.eq.s32.totalorder %s29, 1
      %p131 = por %p129, %p130
      %p132 = scmp.ne.s32.totalorder %s123, %s124
      %p133 = scmp.eq.s32.totalorder %s29, 0
      %p134 = por %p132, %p133
      %p135 = scmp.ne.s32.totalorder %s123, %s124
      %p136 = scmp.eq.s32.totalorder %s30, 1
      %p137 = por %p135, %p136
      %p139 = scmp.ne.s32.totalorder %s124, %s138
      %p140 = scmp.eq.s32.totalorder %s30, 0
      %p141 = por %p139, %p140
      %s143 = sadd.s32 %s142, 1
      %p146 = scmp.eq.s32.totalorder %s24, 1
      %p147 = scmp.ne.s32.totalorder %s142, %s144
      %p148 = scmp.eq.s32.totalorder %s24, 0
      %p149 = por %p147, %p148
      %p150 = scmp.ne.s32.totalorder %s142, %s144
      %p151 = scmp.eq.s32.totalorder %s29, 1
      %p152 = por %p150, %p151
      %p153 = scmp.ne.s32.totalorder %s144, %s145
      %p154 = scmp.eq.s32.totalorder %s29, 0
      %p155 = por %p153, %p154
      %p156 = scmp.ne.s32.totalorder %s144, %s145
      %p157 = scmp.eq.s32.totalorder %s30, 1
      %p158 = por %p156, %p157
      %p160 = scmp.ne.s32.totalorder %s145, %s159
      %p161 = scmp.eq.s32.totalorder %s30, 0
      %p162 = por %p160, %p161
      %s164 = sadd.s32 %s163, 1
      %p167 = scmp.eq.s32.totalorder %s24, 1
      %p168 = scmp.ne.s32.totalorder %s163, %s165
      %p169 = scmp.eq.s32.totalorder %s24, 0
      %p170 = por %p168, %p169
      %p171 = scmp.ne.s32.totalorder %s163, %s165
      %p172 = scmp.eq.s32.totalorder %s29, 1
      %p173 = por %p171, %p172
      %p174 = scmp.ne.s32.totalorder %s165, %s166
      %p175 = scmp.eq.s32.totalorder %s29, 0
      %p176 = por %p174, %p175
      %p177 = scmp.ne.s32.totalorder %s165, %s166
      %p178 = scmp.eq.s32.totalorder %s30, 1
      %p179 = por %p177, %p178
      %p181 = scmp.ne.s32.totalorder %s166, %s180
      %p182 = scmp.eq.s32.totalorder %s30, 0
      %p183 = por %p181, %p182
      %s184 = ssub.s32 %s31, %s43
      %s185 = ssub.s32 %s32, %s39
      %s186 = sor.u32 %s184, %s185
      %p187 = scmp.eq.s32.totalorder %s186, 0
      %s189 = sadd.s32 %s188, 1
      %s190 = scalar_select %p187, %s188, %s189
      %p193 = pneg %p187
      %p194 = scmp.eq.s32.totalorder %s24, 1
      %p195 = por %p193, %p194
      %p196 = scmp.ne.s32.totalorder %s188, %s191
      %p197 = scmp.eq.s32.totalorder %s24, 0
      %p198 = por %p196, %p197
      %p199 = scmp.ne.s32.totalorder %s188, %s191
      %p200 = scmp.eq.s32.totalorder %s29, 1
      %p201 = por %p199, %p200
      %p202 = scmp.ne.s32.totalorder %s191, %s192
      %p203 = scmp.eq.s32.totalorder %s29, 0
      %p204 = por %p202, %p203
      %p205 = scmp.ne.s32.totalorder %s191, %s192
      %p206 = scmp.eq.s32.totalorder %s30, 1
      %p207 = por %p205, %p206
      %p209 = scmp.ne.s32.totalorder %s192, %s208
      %p210 = scmp.eq.s32.totalorder %s30, 0
      %p211 = por %p209, %p210
      %s212 = ssub.s32 %s31, %s43
      %s213 = ssub.s32 %s32, %s39
      %s214 = sor.u32 %s212, %s213
      %p215 = scmp.eq.s32.totalorder %s214, 0
      %s217 = sadd.s32 %s216, 1
      %s218 = scalar_select %p215, %s216, %s217
      %p221 = pneg %p215
      %p222 = scmp.eq.s32.totalorder %s24, 1
      %p223 = por %p221, %p222
      %p224 = scmp.ne.s32.totalorder %s216, %s219
      %p225 = scmp.eq.s32.totalorder %s24, 0
      %p226 = por %p224, %p225
      %p227 = scmp.ne.s32.totalorder %s216, %s219
      %p228 = scmp.eq.s32.totalorder %s29, 1
      %p229 = por %p227, %p228
      %p230 = scmp.ne.s32.totalorder %s219, %s220
      %p231 = scmp.eq.s32.totalorder %s29, 0
      %p232 = por %p230, %p231
      %p233 = scmp.ne.s32.totalorder %s219, %s220
      %p234 = scmp.eq.s32.totalorder %s30, 1
      %p235 = por %p233, %p234
      %p237 = scmp.ne.s32.totalorder %s220, %s236
      %p238 = scmp.eq.s32.totalorder %s30, 0
      %p239 = por %p237, %p238
      %s240 = ssub.s32 %s31, %s43
      %s241 = ssub.s32 %s32, %s39
      %s242 = sor.u32 %s240, %s241
      %p243 = scmp.eq.s32.totalorder %s242, 0
      %s245 = sadd.s32 %s244, 1
      %s246 = scalar_select %p243, %s244, %s245
      %p249 = pneg %p243
      %p250 = scmp.eq.s32.totalorder %s24, 1
      %p251 = por %p249, %p250
      %p252 = scmp.ne.s32.totalorder %s244, %s247
      %p253 = scmp.eq.s32.totalorder %s24, 0
      %p254 = por %p252, %p253
      %p255 = scmp.ne.s32.totalorder %s244, %s247
      %p256 = scmp.eq.s32.totalorder %s29, 1
      %p257 = por %p255, %p256
      %p258 = scmp.ne.s32.totalorder %s247, %s248
      %p259 = scmp.eq.s32.totalorder %s29, 0
      %p260 = por %p258, %p259
      %p261 = scmp.ne.s32.totalorder %s247, %s248
      %p262 = scmp.eq.s32.totalorder %s30, 1
      %p263 = por %p261, %p262
      %p265 = scmp.ne.s32.totalorder %s248, %s264
      %p266 = scmp.eq.s32.totalorder %s30, 0
      %p267 = por %p265, %p266
      %p268 = scmp.le.s32.totalorder 1, %s24
      %p269 = scmp.lt.s32.totalorder %s24, 3
      %p270 = pnand %p268, %p269
      %p271 = pneg %p270
      // Predicated region
      $region9: #{tpu_custom_call.1} parent=5 // pred_check
        _
      $region10: #{tpu_custom_call.1} parent=5 // pred_check_branch
        %273 = sbr.rel (%p270) target = $region12
      $region11: #{tpu_custom_call.1} parent=5 // pred_region
        %s274 = ssub.s32 %s24, 1
        // Predicated region
        $region13: #{tpu_custom_call.1} parent=11 // pred_check
          %p275 = pneg %p113
        $region14: #{tpu_custom_call.1} parent=11 // pred_check_branch
          %277 = sbr.rel (%p275) target = $region16
        $region15: #{tpu_custom_call.1} parent=11 // pred_region
          _
        $region16: #{tpu_custom_call.1} parent=11 // pred_fallthru
          _
        // Predicated region
        $region17: #{tpu_custom_call.1} parent=11 // pred_check
          %p278 = pneg %p134
        $region18: #{tpu_custom_call.1} parent=11 // pred_check_branch
          %280 = sbr.rel (%p278) target = $region20
        $region19: #{tpu_custom_call.1} parent=11 // pred_region
          _
        $region20: #{tpu_custom_call.1} parent=11 // pred_fallthru
          _
        // Predicated region
        $region21: #{tpu_custom_call.1} parent=11 // pred_check
          %p281 = pneg %p155
        $region22: #{tpu_custom_call.1} parent=11 // pred_check_branch
          %283 = sbr.rel (%p281) target = $region24
        $region23: #{tpu_custom_call.1} parent=11 // pred_region
          _
        $region24: #{tpu_custom_call.1} parent=11 // pred_fallthru
          _
        // Predicated region
        $region25: #{tpu_custom_call.1} parent=11 // pred_check
          %p284 = pneg %p176
        $region26: #{tpu_custom_call.1} parent=11 // pred_check_branch
          %286 = sbr.rel (%p284) target = $region28
        $region27: #{tpu_custom_call.1} parent=11 // pred_region
          _
        $region28: #{tpu_custom_call.1} parent=11 // pred_fallthru
          _
      $region12: #{tpu_custom_call.1} parent=5 // pred_fallthru
        _
      %p287 = scmp.lt.s32.totalorder %s24, 2
      // Predicated region
      $region29: #{tpu_custom_call.1} parent=5 // pred_check
        %p288 = pneg %p287
      $region30: #{tpu_custom_call.1} parent=5 // pred_check_branch
        %290 = sbr.rel (%p288) target = $region32
      $region31: #{tpu_custom_call.1} parent=5 // pred_region
        // Predicated region
        $region33: #{tpu_custom_call.1} parent=31 // pred_check
          %p291 = pneg %p58
        $region34: #{tpu_custom_call.1} parent=31 // pred_check_branch
          %293 = sbr.rel (%p291) target = $region36
        $region35: #{tpu_custom_call.1} parent=31 // pred_region
          %s294 = sand.u32 %s48, 1
          %s295 = scalar_lea.sflag [#allocation3], %s294
          %s296 = sand.u32 %s48, 1
          %s297 = smul.addr %s296, 6
          %s298 = scalar_lea.vmem [#allocation2], %s297
          %s300 = ssub.s32 96, 96
          %301 = vsyncadd %s295, %s300
          %s302 = smul.addr %s32, 3
          %s303 = smul.addr %s31, 3
          %s304 = sadd.s32 %s302, %s303
          %s305 = smul.addr %s304, 32
          %s306 = scalar_lea.hbm %s0, %s305
          %s308 = sshll.u32 %s298, 4
          %s309 = int_to_ptr.vmem [resolvable:$true] %s308
          %311 = dma.hbm_to_vmem [thread:$0]  %s306, 96, %s309, %s295
        $region36: #{tpu_custom_call.1} parent=31 // pred_fallthru
          _
        // Predicated region
        $region37: #{tpu_custom_call.1} parent=31 // pred_check
          %p312 = pneg %p86
        $region38: #{tpu_custom_call.1} parent=31 // pred_check_branch
          %314 = sbr.rel (%p312) target = $region40
        $region39: #{tpu_custom_call.1} parent=31 // pred_region
          %s315 = smul.u32 2, %s32
          %p316 = scmp.lt.s32.totalorder %s31, 1
          %s317 = scalar_select %p316, %s31, 1
          %p318 = scmp.lt.s32.totalorder %s315, 1
          %s319 = scalar_select %p318, %s315, 1
          %s320 = smul.addr %s317, 2
          %s321 = sadd.s32 %s319, %s320
          %s322 = smul.addr %s321, 4
          %s323 = scalar_lea.vmem %s1, %s322
          %s324 = smul.u32 2, %s32
        $region40: #{tpu_custom_call.1} parent=31 // pred_fallthru
          _
      $region32: #{tpu_custom_call.1} parent=5 // pred_fallthru
        _
      %p325 = scmp.le.s32.totalorder 1, %s24
      %p326 = scmp.lt.s32.totalorder %s24, 3
      %p327 = pnand %p325, %p326
      %p328 = pneg %p327
      // Predicated region
      $region41: #{tpu_custom_call.1} parent=5 // pred_check
        _
      $region42: #{tpu_custom_call.1} parent=5 // pred_check_branch
        %330 = sbr.rel (%p327) target = $region44
      $region43: #{tpu_custom_call.1} parent=5 // pred_region
        %s331 = ssub.s32 %s24, 1
        %s332 = sand.u32 %s51, 1
        %s333 = scalar_lea.sflag [#allocation3], %s332
        %s334 = sand.u32 %s51, 1
        %s335 = smul.addr %s334, 6
        %s336 = scalar_lea.vmem [#allocation2], %s335
        // Predicated region
        $region45: #{tpu_custom_call.1} parent=43 // pred_check
          %p337 = pneg %p64
        $region46: #{tpu_custom_call.1} parent=43 // pred_check_branch
          %339 = sbr.rel (%p337) target = $region48
        $region47: #{tpu_custom_call.1} parent=43 // pred_region
          %340 = dma.done %s333, 96
        $region48: #{tpu_custom_call.1} parent=43 // pred_fallthru
          _
        %s341 = sand.u32 %s51, 1
        %s342 = scalar_lea.sflag [#allocation3], %s341
        %s343 = sand.u32 %s51, 1
        %s344 = smul.addr %s343, 6
        %s345 = scalar_lea.vmem [#allocation2], %s344
        %p346 = pneg %p64
        %p347 = pneg %p61
        %s348 = smul.u32 2, %s34
        %p349 = scmp.lt.s32.totalorder %s33, 1
        %s350 = scalar_select %p349, %s33, 1
        %p351 = scmp.lt.s32.totalorder %s348, 1
        %s352 = scalar_select %p351, %s348, 1
        %s353 = smul.addr %s350, 2
        %s354 = sadd.s32 %s352, %s353
        %s355 = smul.addr %s354, 4
        %s356 = scalar_lea.vmem %s1, %s355
        %p357 = pneg %p92
        %p358 = pneg %p89
        %p359 = pneg %p113
        %p360 = pneg %p110
        %p361 = pneg %p134
        %p362 = pneg %p131
        %p363 = pneg %p155
        %p364 = pneg %p152
        %p365 = pneg %p176
        %p366 = pneg %p173
        %p367 = pneg %p204
        %p368 = pneg %p201
        %s369 = sand.u32 %s191, 1
        %s370 = scalar_lea.sflag [#allocation4], %s369
        %s371 = sand.u32 %s191, 1
        %s372 = smul.addr %s371, 8
        %s373 = scalar_lea.vmem [#allocation5], %s372
        %p374 = pneg %p232
        %p375 = pneg %p229
        %s376 = sand.u32 %s29, 1
        %s377 = scalar_lea.sflag [#allocation7], %s376
        %s378 = sand.u32 %s219, 1
        %s379 = smul.addr %s378, 2
        %s380 = scalar_lea.vmem [#allocation6], %s379
        %p381 = pneg %p260
        %p382 = pneg %p257
        %s383 = sand.u32 %s29, 1
        %s384 = scalar_lea.sflag [#allocation7], %s383
        %s385 = sand.u32 %s247, 1
        %s386 = smul.addr %s385, 8
        %s387 = scalar_lea.vmem [#allocation8], %s386
        %s388 = smul.u32 2, %s34
        %p389 = scmp.lt.s32.totalorder %s33, 1
        %s390 = scalar_select %p389, %s33, 1
        %p391 = scmp.lt.s32.totalorder %s388, 1
        %s392 = scalar_select %p391, %s388, 1
        %s393 = smul.addr %s390, 2
        %s394 = sadd.s32 %s392, %s393
        %s395 = smul.addr %s394, 4
        %s396 = scalar_lea.vmem %s1, %s395
        %s397 = smul.u32 2, %s34
        %s398 = smul.u32 2, %s34
        %s399 = smul.u32 2, %s34
        %v401 = vlaneseq
        %v402 = vand.u32 %v401, 127
        %v403 = vadd.s32 %v402, 128
        %vm404 = vcmp.lt.s32.totalorder %v402, 0
        %v405 = vsub.s32 0, %v402
        %v406 = vsel %vm404, %v405, %v402
        %v407 = vshrl.u32 %v406, 4
        %v408 = vand.u32 %v406, 15
        %v409 = vsub.s32 0, %v408
        %v410 = vsel %vm404, %v409, %v408
        %vm411 = vcmp.lt.s32.totalorder %v403, 0
        %v412 = vsub.s32 0, %v403
        %v413 = vsel %vm411, %v412, %v403
        %v414 = vshrl.u32 %v413, 4
        %v415 = vand.u32 %v413, 15
        %v416 = vsub.s32 0, %v415
        %v417 = vsel %vm411, %v416, %v415
        %vm418 = vcmp.ne.s32.totalorder %v410, 0
        %vm419 = vcmp.ne.s32.totalorder %v417, 0
        %vm420 = vcmp.lt.s32.totalorder %v410, 0
        %vm421 = vcmp.lt.s32.totalorder %v417, 0
        %vm422 = vmand %vm420, %vm418
        %vm423 = vmand %vm421, %vm419
        %v424 = vadd.s32 %v410, 16
        %v425 = vadd.s32 %v417, 16
        %v426 = vsel %vm422, %v424, %v410
        %v427 = vsel %vm423, %v425, %v417
        %vm428 = vcmp.ne.s32.totalorder %v426, 0
        %vm429 = vcmp.ne.s32.totalorder %v427, 0
        %v430 = vsel %vm428, 1, 0
        %v431 = vsel %vm429, 1, 0
        %v432 = vcvt.s32.f32 %v430
        %v433 = vcvt.s32.f32 %v431
        %v434 = vpack.c.bf16 %v432, %v432
        %v435 = vpack.c.bf16 %v433, %v433
        %vm436 = vcmp.ne.s32.totalorder %v426, 15
        %vm437 = vcmp.ne.s32.totalorder %v427, 15
        %v438 = vsel %vm436, 1, 0
        %v439 = vsel %vm437, 1, 0
        %v440 = vcvt.s32.f32 %v438
        %v441 = vcvt.s32.f32 %v439
        %v442 = vpack.c.bf16 %v440, %v440
        %v443 = vpack.c.bf16 %v441, %v441
        %v444 = vld [vmem:[%s336] sm:$0x3f]
        %v447 = vcombine.low %v434, %v435
        %v449 = vunpack.c.l.s4 1983009808
        %v450 = vunpack.c.0.s8 %v449
        %v451 = vlaneseq
        %v452 = vshrl.u32 %v451, 7
        %v453 = vsub.s32 %v450, %v452
        %v454 = vrot.slane %v447, %v453
        %455 = vrot.lane.b32.xlu0 %v454, 15
        %v456 = vpop.permute.xlu0 %455
        %v457 = vrot.slane %v456, 6
        %vm458 = vcmask 121856
        %v459 = vsel %vm458, %v457, %v456
        %v461 = vmul.bf16 %v444, %v459
        %v464 = vcombine.low %v442, %v443
        %v466 = vunpack.c.l.s4 1983009808
        %v467 = vunpack.c.0.s8 %v466
        %v468 = vlaneseq
        %v469 = vshrl.u32 %v468, 7
        %v470 = vsub.s32 %v467, %v469
        %v471 = vrot.slane %v464, %v470
        %472 = vrot.lane.b32.xlu0 %v471, 17
        %v473 = vpop.permute.xlu0 %472
        %v474 = vrot.slane %v473, 6
        %vm475 = vcmask 138240
        %v476 = vsel %vm475, %v474, %v473
        %v478 = vmul.bf16 %v444, %v476
        %479 = vrot.lane.b32.xlu0 %v454, 31
        %v480 = vpop.permute.xlu0 %479
        %v481 = vrot.slane %v480, 6
        %vm482 = vcmask 252928
        %v483 = vsel %vm482, %v481, %v480
        %v485 = vmul.bf16 %v444, %v483
        %486 = vrot.lane.b32.xlu0 %v471, 33
        %v487 = vpop.permute.xlu0 %486
        %v488 = vrot.slane %v487, 6
        %vm489 = vcmask 269312
        %v490 = vsel %vm489, %v488, %v487
        %v492 = vmul.bf16 %v444, %v490
        %493 = vrot.lane.b32.xlu0 %v454, 47
        %v494 = vpop.permute.xlu0 %493
        %v495 = vrot.slane %v494, 6
        %vm496 = vcmask 384000
        %v497 = vsel %vm496, %v495, %v494
        %v499 = vmul.bf16 %v444, %v497
        %500 = vrot.lane.b32.xlu0 %v471, 49
        %v501 = vpop.permute.xlu0 %500
        %v502 = vrot.slane %v501, 6
        %vm503 = vcmask 400384
        %v504 = vsel %vm503, %v502, %v501
        %v506 = vmul.bf16 %v444, %v504
        %v508 = vcombine.high %v461, %v461
        %v510 = vunpack.c.l.s4 1983009808
        %v511 = vunpack.c.0.s8 %v510
        %v512 = vlaneseq
        %v513 = vshrl.u32 %v512, 7
        %v514 = vsub.s32 %v511, %v513
        %v515 = vrot.slane %v461, %v514
        %v517 = vunpack.c.l.s4 1983009808
        %v518 = vunpack.c.0.s8 %v517
        %v519 = vlaneseq
        %v520 = vshrl.u32 %v519, 7
        %v521 = vsub.s32 %v518, %v520
        %v522 = vrot.slane %v508, %v521
        %v523 = vcombine.high %v515, %v515
        %v525 = vcombine.low %v444, %v444
        %v527 = vunpack.c.l.s4 1983009808
        %v528 = vunpack.c.0.s8 %v527
        %v529 = vlaneseq
        %v530 = vshrl.u32 %v529, 7
        %v531 = vsub.s32 %v528, %v530
        %v532 = vrot.slane %v525, %v531
        %v534 = vunpack.c.l.s4 1983009808
        %v535 = vunpack.c.0.s8 %v534
        %v536 = vlaneseq
        %v537 = vshrl.u32 %v536, 7
        %v538 = vsub.s32 %v535, %v537
        %v539 = vrot.slane %v444, %v538
        %v540 = vcombine.high %v532, %v532
        %541 = vrot.lane.b32.xlu0 %v532, 127
        %v542 = vpop.permute.xlu0 %541
        %543 = vrot.lane.b32.xlu0 %v540, 127
        %v544 = vpop.permute.xlu0 %543
        %545 = vrot.lane.b32.xlu0 %v539, 127
        %v546 = vpop.permute.xlu0 %545
        %vm547 = vcmask 1039360
        %v548 = vsel %vm547, %v542, %v544
        %v549 = vsel %vm547, %v544, %v546
        %v551 = vcombine.high %v478, %v478
        %v553 = vunpack.c.l.s4 1983009808
        %v554 = vunpack.c.0.s8 %v553
        %v555 = vlaneseq
        %v556 = vshrl.u32 %v555, 7
        %v557 = vsub.s32 %v554, %v556
        %v558 = vrot.slane %v478, %v557
        %v560 = vunpack.c.l.s4 1983009808
        %v561 = vunpack.c.0.s8 %v560
        %v562 = vlaneseq
        %v563 = vshrl.u32 %v562, 7
        %v564 = vsub.s32 %v561, %v563
        %v565 = vrot.slane %v551, %v564
        %v566 = vcombine.low %v558, %v558
        %v567 = vcombine.low %v565, %v565
        %568 = vrot.lane.b32.xlu0 %v566, 126
        %v569 = vpop.permute.xlu0 %568
        %570 = vrot.lane.b32.xlu0 %v558, 126
        %v571 = vpop.permute.xlu0 %570
        %572 = vrot.lane.b32.xlu0 %v567, 126
        %v573 = vpop.permute.xlu0 %572
        %vm574 = vcmask 1031168
        %v575 = vsel %vm574, %v569, %v571
        %v576 = vsel %vm574, %v571, %v573
        %v578 = vcombine.low %v485, %v485
        %v580 = vunpack.c.l.s4 1983009808
        %v581 = vunpack.c.0.s8 %v580
        %v582 = vlaneseq
        %v583 = vshrl.u32 %v582, 7
        %v584 = vsub.s32 %v581, %v583
        %v585 = vrot.slane %v578, %v584
        %v587 = vunpack.c.l.s4 1983009808
        %v588 = vunpack.c.0.s8 %v587
        %v589 = vlaneseq
        %v590 = vshrl.u32 %v589, 7
        %v591 = vsub.s32 %v588, %v590
        %v592 = vrot.slane %v485, %v591
        %v593 = vcombine.low %v585, %v585
        %v594 = vcombine.low %v592, %v592
        %595 = vrot.lane.b32.xlu0 %v593, 112
        %v596 = vpop.permute.xlu0 %595
        %597 = vrot.lane.b32.xlu0 %v585, 112
        %v598 = vpop.permute.xlu0 %597
        %599 = vrot.lane.b32.xlu0 %v594, 112
        %v600 = vpop.permute.xlu0 %599
        %vm601 = vcmask 916480
        %v602 = vsel %vm601, %v596, %v598
        %v603 = vsel %vm601, %v598, %v600
        %v604 = vcombine.high %v444, %v444
        %v606 = vunpack.c.l.s4 1983009808
        %v607 = vunpack.c.0.s8 %v606
        %v608 = vlaneseq
        %v609 = vshrl.u32 %v608, 7
        %v610 = vsub.s32 %v607, %v609
        %v611 = vrot.slane %v604, %v610
        %v612 = vcombine.high %v539, %v539
        %613 = vrot.lane.b32.xlu0 %v539, 111
        %v614 = vpop.permute.xlu0 %613
        %615 = vrot.lane.b32.xlu0 %v612, 111
        %v616 = vpop.permute.xlu0 %615
        %617 = vrot.lane.b32.xlu0 %v611, 111
        %v618 = vpop.permute.xlu0 %617
        %vm619 = vcmask 908288
        %v620 = vsel %vm619, %v614, %v616
        %v621 = vsel %vm619, %v616, %v618
        %v623 = vcombine.low %v492, %v492
        %v625 = vunpack.c.l.s4 1983009808
        %v626 = vunpack.c.0.s8 %v625
        %v627 = vlaneseq
        %v628 = vshrl.u32 %v627, 7
        %v629 = vsub.s32 %v626, %v628
        %v630 = vrot.slane %v623, %v629
        %v632 = vunpack.c.l.s4 1983009808
        %v633 = vunpack.c.0.s8 %v632
        %v634 = vlaneseq
        %v635 = vshrl.u32 %v634, 7
        %v636 = vsub.s32 %v633, %v635
        %v637 = vrot.slane %v492, %v636
        %v638 = vcombine.high %v630, %v630
        %639 = vrot.lane.b32.xlu0 %v630, 110
        %v640 = vpop.permute.xlu0 %639
        %641 = vrot.lane.b32.xlu0 %v638, 110
        %v642 = vpop.permute.xlu0 %641
        %643 = vrot.lane.b32.xlu0 %v637, 110
        %v644 = vpop.permute.xlu0 %643
        %vm645 = vcmask 900096
        %v646 = vsel %vm645, %v640, %v642
        %v647 = vsel %vm645, %v642, %v644
        %v649 = vcombine.high %v499, %v499
        %v651 = vunpack.c.l.s4 1983009808
        %v652 = vunpack.c.0.s8 %v651
        %v653 = vlaneseq
        %v654 = vshrl.u32 %v653, 7
        %v655 = vsub.s32 %v652, %v654
        %v656 = vrot.slane %v499, %v655
        %v658 = vunpack.c.l.s4 1983009808
        %v659 = vunpack.c.0.s8 %v658
        %v660 = vlaneseq
        %v661 = vshrl.u32 %v660, 7
        %v662 = vsub.s32 %v659, %v661
        %v663 = vrot.slane %v649, %v662
        %v664 = vcombine.low %v656, %v656
        %v665 = vcombine.low %v663, %v663
        %666 = vrot.lane.b32.xlu0 %v664, 96
        %v667 = vpop.permute.xlu0 %666
        %668 = vrot.lane.b32.xlu0 %v656, 96
        %v669 = vpop.permute.xlu0 %668
        %670 = vrot.lane.b32.xlu0 %v665, 96
        %v671 = vpop.permute.xlu0 %670
        %vm672 = vcmask 785408
        %v673 = vsel %vm672, %v667, %v669
        %v674 = vsel %vm672, %v669, %v671
        %v675 = vcombine.low %v532, %v532
        %v676 = vcombine.low %v539, %v539
        %677 = vrot.lane.b32.xlu0 %v675, 95
        %v678 = vpop.permute.xlu0 %677
        %679 = vrot.lane.b32.xlu0 %v532, 95
        %v680 = vpop.permute.xlu0 %679
        %681 = vrot.lane.b32.xlu0 %v676, 95
        %v682 = vpop.permute.xlu0 %681
        %vm683 = vcmask 777216
        %v684 = vsel %vm683, %v678, %v680
        %v685 = vsel %vm683, %v680, %v682
        %v687 = vcombine.high %v506, %v506
        %v689 = vunpack.c.l.s4 1983009808
        %v690 = vunpack.c.0.s8 %v689
        %v691 = vlaneseq
        %v692 = vshrl.u32 %v691, 7
        %v693 = vsub.s32 %v690, %v692
        %v694 = vrot.slane %v506, %v693
        %v696 = vunpack.c.l.s4 1983009808
        %v697 = vunpack.c.0.s8 %v696
        %v698 = vlaneseq
        %v699 = vshrl.u32 %v698, 7
        %v700 = vsub.s32 %v697, %v699
        %v701 = vrot.slane %v687, %v700
        %v702 = vcombine.high %v694, %v694
        %703 = vrot.lane.b32.xlu0 %v694, 94
        %v704 = vpop.permute.xlu0 %703
        %705 = vrot.lane.b32.xlu0 %v702, 94
        %v706 = vpop.permute.xlu0 %705
        %707 = vrot.lane.b32.xlu0 %v701, 94
        %v708 = vpop.permute.xlu0 %707
        %vm709 = vcmask 769024
        %v710 = vsel %vm709, %v704, %v706
        %v711 = vsel %vm709, %v706, %v708
        %vm712 = vcmask 1041408
        %v715 = vsel %vm712, %v515, %v548
        %v718 = vsel %vm712, %v523, %v549
        %v721 = vsel %vm712, %v522, %v546
        %vm722 = vcmask 1043456
        %v724 = vsel %vm722, %v715, %v575
        %v726 = vsel %vm722, %v718, %v576
        %v728 = vsel %vm722, %v721, %v573
        %vm729 = vcmask 1045504
        %v731 = vsel %vm729, %v724, %v602
        %v733 = vsel %vm729, %v726, %v603
        %v735 = vsel %vm729, %v728, %v600
        %v738 = vsel %vm712, %v620, %v646
        %v741 = vsel %vm712, %v621, %v647
        %v744 = vsel %vm712, %v618, %v644
        %v746 = vsel %vm722, %v738, %v673
        %v748 = vsel %vm722, %v741, %v674
        %v750 = vsel %vm722, %v744, %v671
        %v752 = vsel %vm729, %v746, %v684
        %v754 = vsel %vm729, %v748, %v685
        %v756 = vsel %vm729, %v750, %v682
        %v757 = vld [vmem:[%s2] sm:$0xf]
        %v758 = vld [vmem:[%s2 + $0x4] sm:$0xf]
        %v759 = vld [vmem:[%s2 + $0x8] sm:$0xf]
        %v760 = vld [vmem:[%s2 + $0xc] sm:$0xf]
        %v761 = vld [vmem:[%s3] sm:$0xff]
        %v762 = vld [vmem:[%s3 + $0x8] sm:$0xff]
        %v763 = vld [vmem:[%s3 + $0x10] sm:$0xff]
        %v764 = vld [vmem:[%s3 + $0x18] sm:$0xff]
        %766 = vset.pattern.permute.xlu0 0
        %767 = vperm.xlu0 %766, %v761
        %v768 = vpop.permute.xlu0 %767
        %771 = vset.pattern.permute.xlu0 0
        %772 = vperm.xlu0 %771, %v762
        %v773 = vpop.permute.xlu0 %772
        %776 = vset.pattern.permute.xlu0 0
        %777 = vperm.xlu0 %776, %v763
        %v778 = vpop.permute.xlu0 %777
        %781 = vset.pattern.permute.xlu0 0
        %782 = vperm.xlu0 %781, %v764
        %v783 = vpop.permute.xlu0 %782
        %v789 = vunpack.c.l.b16 %v757
        %v790 = vunpack.c.l.b16 %v758
        %v791 = vunpack.c.l.b16 %v759
        %v792 = vunpack.c.l.b16 %v760
        %v793 = vpack.c.b16 %v790, %v789
        %v794 = vpack.c.b16 %v792, %v791
        %801 = vrot.lane.b32.xlu0 %v731, 113
        %v802 = vpop.permute.xlu0 %801
        %803 = vrot.lane.b32.xlu0 %v733, 113
        %v804 = vpop.permute.xlu0 %803
        %805 = vrot.lane.b32.xlu0 %v735, 113
        %v806 = vpop.permute.xlu0 %805
        %807 = vrot.lane.b32.xlu0 %v752, 113
        %v808 = vpop.permute.xlu0 %807
        %809 = vrot.lane.b32.xlu0 %v754, 113
        %v810 = vpop.permute.xlu0 %809
        %811 = vrot.lane.b32.xlu0 %v756, 113
        %v812 = vpop.permute.xlu0 %811
        %813 = vrot.lane.b32.xlu0 %v710, 113
        %v814 = vpop.permute.xlu0 %813
        %815 = vrot.lane.b32.xlu0 %v711, 113
        %v816 = vpop.permute.xlu0 %815
        %817 = vrot.lane.b32.xlu0 %v708, 113
        %v818 = vpop.permute.xlu0 %817
        %vm819 = vcmask 924672
        %v820 = vsel %vm819, %v802, %v804
        %v821 = vsel %vm819, %v804, %v806
        %v822 = vsel %vm819, %v808, %v810
        %v823 = vsel %vm819, %v810, %v812
        %v824 = vsel %vm819, %v814, %v816
        %v825 = vsel %vm819, %v816, %v818
        %vm830 = vcmask 293888
        %v832 = vsel %vm830, %v793, 0
        %v835 = vsel %vm830, %v794, 0
        %v838 = vsel %vm712, %v824, 0
        %v841 = vsel %vm712, %v825, 0
        %843 = vmatprep.subr.bf16.mxu0 0
        %844 = vmatpush1.bf16.msra.mxu0 0
        %845 = vmatprep.subr.bf16.mxu0 0
        %846 = vmatpush1.bf16.msra.mxu0 0
        %847 = vmatprep.subr.bf16.mxu0 0
        %848 = vmatpush1.bf16.msra.mxu0 0
        %849 = vmatprep.subr.bf16.mxu0 0
        %850 = vmatpush1.bf16.msra.mxu0 0
        %851 = vmatprep.subr.bf16.mxu0 0
        %852 = vmatpush1.bf16.msra.mxu0 0
        %853 = vmatprep.subr.bf16.mxu0 %v841
        %854 = vmatpush1.bf16.msra.mxu0 %v838
        %855 = vmatprep.subr.bf16.mxu0 %v823
        %856 = vmatpush1.bf16.msra.mxu0 %v822
        %857 = vmatprep.subr.bf16.mxu0 %v821
        %858 = vmatpush1.bf16.msra.mxu0 %v820
        %859 = vmatprep.subr.bf16.mxu0 0
        %860 = vmatpush2.bf16.msra.mxu0 0
        %861 = vmatprep.subr.bf16.mxu0 0
        %862 = vmatpush2.bf16.msra.mxu0 0
        %863 = vmatprep.subr.bf16.mxu0 0
        %864 = vmatpush2.bf16.msra.mxu0 0
        %865 = vmatprep.subr.bf16.mxu0 0
        %866 = vmatpush2.bf16.msra.mxu0 0
        %867 = vmatprep.subr.bf16.mxu0 0
        %868 = vmatpush2.bf16.msra.mxu0 0
        %869 = vmatprep.subr.bf16.mxu0 0
        %870 = vmatpush2.bf16.msra.mxu0 0
        %871 = vmatprep.subr.bf16.mxu0 0
        %872 = vmatpush2.bf16.msra.mxu0 0
        %873 = vmatprep.subr.bf16.mxu0 0
        %874 = vmatpush2.bf16.msra.mxu0 0
        %875 = vmatprep.mubr.bf16.mxu0 0
        %876 = vmatmul.mubr.bf16.gmra.mxu0 %v832
        %v877 = vpop.f32.mrf.mxu0
        %v878 = vadd.f32 %v768, %v877
        %v879 = vpop.f32.mrf.mxu0
        %v880 = vadd.f32 %v768, %v879
        %v881 = vpop.f32.mrf.mxu0
        %v882 = vadd.f32 %v773, %v881
        %v883 = vpop.f32.mrf.mxu0
        %v884 = vadd.f32 %v773, %v883
        %885 = vmatprep.mubr.bf16.mxu0 0
        %886 = vmatmul.mubr.bf16.gmra.mxu0 %v835
        %v887 = vpop.f32.mrf.mxu0
        %v888 = vadd.f32 %v778, %v887
        %v889 = vpop.f32.mrf.mxu0
        %v890 = vadd.f32 %v778, %v889
        %v891 = vpop.f32.mrf.mxu0
        %v892 = vadd.f32 %v783, %v891
        %v893 = vpop.f32.mrf.mxu0
        %v894 = vadd.f32 %v783, %v893
        %895 = vdwg.mxu0
        %v896 = vmax.f32 %v878, 0.0
        %v897 = vmax.f32 %v880, 0.0
        %v898 = vmax.f32 %v882, 0.0
        %v899 = vmax.f32 %v884, 0.0
        %v900 = vmax.f32 %v888, 0.0
        %v901 = vmax.f32 %v890, 0.0
        %v902 = vmax.f32 %v892, 0.0
        %v903 = vmax.f32 %v894, 0.0
        %v904 = vld [vmem:[%s4] sm:$0x3]
        %v905 = vpack.c.bf16 %v898, %v896
        %v906 = vpack.c.bf16 %v899, %v897
        %v907 = vpack.c.bf16 %v902, %v900
        %v908 = vpack.c.bf16 %v903, %v901
        %v909 = vld [vmem:[%s5] sm:$0xf]
        %911 = vset.pattern.permute.xlu0 0
        %912 = vperm.xlu0 %911, %v909
        %v913 = vpop.permute.xlu0 %912
        %vm915 = vcmask 261120
        %v917 = vsel %vm915, %v904, 0
        %919 = vmatprep.subr.bf16.mxu0 0
        %920 = vmatpush1.bf16.msra.mxu0 0
        %921 = vmatprep.subr.bf16.mxu0 0
        %922 = vmatpush1.bf16.msra.mxu0 0
        %923 = vmatprep.subr.bf16.mxu0 0
        %924 = vmatpush1.bf16.msra.mxu0 0
        %925 = vmatprep.subr.bf16.mxu0 0
        %926 = vmatpush1.bf16.msra.mxu0 0
        %927 = vmatprep.subr.bf16.mxu0 0
        %928 = vmatpush1.bf16.msra.mxu0 0
        %929 = vmatprep.subr.bf16.mxu0 0
        %930 = vmatpush1.bf16.msra.mxu0 0
        %931 = vmatprep.subr.bf16.mxu0 %v908
        %932 = vmatpush1.bf16.msra.mxu0 %v907
        %933 = vmatprep.subr.bf16.mxu0 %v906
        %934 = vmatpush1.bf16.msra.mxu0 %v905
        %935 = vmatprep.subr.bf16.mxu0 0
        %936 = vmatpush2.bf16.msra.mxu0 0
        %937 = vmatprep.subr.bf16.mxu0 0
        %938 = vmatpush2.bf16.msra.mxu0 0
        %939 = vmatprep.subr.bf16.mxu0 0
        %940 = vmatpush2.bf16.msra.mxu0 0
        %941 = vmatprep.subr.bf16.mxu0 0
        %942 = vmatpush2.bf16.msra.mxu0 0
        %943 = vmatprep.subr.bf16.mxu0 0
        %944 = vmatpush2.bf16.msra.mxu0 0
        %945 = vmatprep.subr.bf16.mxu0 0
        %946 = vmatpush2.bf16.msra.mxu0 0
        %947 = vmatprep.subr.bf16.mxu0 0
        %948 = vmatpush2.bf16.msra.mxu0 0
        %949 = vmatprep.subr.bf16.mxu0 0
        %950 = vmatpush2.bf16.msra.mxu0 0
        %951 = vmatprep.mubr.bf16.mxu0 0
        %952 = vmatmul.mubr.bf16.gmra.mxu0 %v917
        %v953 = vpop.f32.mrf.mxu0
        %v954 = vadd.f32 %v913, %v953
        %v955 = vpop.f32.mrf.mxu0
        %v956 = vadd.f32 %v913, %v955
        %v957 = vpop.f32.mrf.mxu0
        %v958 = vpop.f32.mrf.mxu0
        %959 = vdwg.mxu0
        %v960 = vxor.u32 %v954, 2147483648
        %v961 = vxor.u32 %v956, 2147483648
        %v962 = vmul.f32 %v960, 1.442695
        %v963 = vpow.pop %v962
        %v964 = vmul.f32 %v961, 1.442695
        %v965 = vpow.pop %v964
        %v966 = vadd.f32 %v963, 1.0
        %v967 = vadd.f32 %v965, 1.0
        %v968 = vrcp.pop %v966
        %v969 = vmul.f32 1.0, %v968
        %v970 = vrcp.pop %v967
        %v971 = vmul.f32 1.0, %v970
        %v972 = vld [vmem:[%s396] sm:$0xff]
        %v975 = vcombine.low %v969, %v971
        %977 = vst [vmem:[%s373] sm:$0xff] %v975
        %vm978 = vcmp.gt.f32.partialorder %v972, 0.0
        %v979 = vsel %vm978, 1, 0
        %v980 = vcvt.s32.f32 %v979
        %v981 = vmax.f32 %v980, -128.0
        %v982 = vmin.f32 %v981, 127.0
        %v983 = vcvt.f32.s32.to.zero.pseudo %v982
        %v984 = vcombine.high %v983, %v983
        %v985 = vpack.c.b16 %v983, %v983
        %v986 = vpack.c.b8 %v985, %v985
        %v987 = vpack.c.b16 %v984, %v984
        %v988 = vpack.c.b8 %v987, %v987
        %v989 = vcombine.low %v986, %v988
        %v991 = vunpack.c.l.s4 1966171168
        %v992 = vunpack.c.0.s8 %v991
        %v993 = vlaneseq
        %v994 = vshrl.u32 %v993, 7
        %v995 = vsub.s32 %v992, %v994
        %v996 = vrot.slane %v989, %v995
        %v998 = vunpack.c.l.s4 1966171168
        %v999 = vunpack.c.0.s8 %v998
        %v1000 = vlaneseq
        %v1001 = vshrl.u32 %v1000, 7
        %v1002 = vsub.s32 %v999, %v1001
        %v1003 = vrot.slane %v996, %v1002
        %1004 = vst [vmem:[%s380] sm:$0x3] %v1003
        %v1006 = vcombine.high %v972, %v972
        %v1008 = vsub.f32 %v969, %v972
        %v1009 = vsub.f32 %v971, %v1006
        %v1010 = vmul.f32 %v1008, %v1008
        %v1011 = vmul.f32 %v1009, %v1009
        %v1012 = vsel %vm722, %v1010, 0.0
        %v1013 = vsel %vm722, %v1011, 0.0
        %v1014 = vadd.f32 %v1012, %v1013
        %1015 = vadd.xlane.f32.xlu0 %v1014
        %v1016 = vpop.xlane.xlu0 %1015
        %v1017 = vrot.slane %v1016, 4
        %v1018 = vadd.f32 %v1016, %v1017
        %v1019 = vrot.slane %v1018, 2
        %v1020 = vadd.f32 %v1018, %v1019
        %v1021 = vrot.slane %v1020, 1
        %v1022 = vadd.f32 %v1020, %v1021
        %s1023 = vtos %v1022
        %v1024 = vstv %s1023
        %1025 = vst [vmem:[%s387] sm:$0xff] %v1024
        %s1026 = sand.u32 %s191, 1
        %s1027 = scalar_lea.sflag [#allocation4], %s1026
        %s1028 = sand.u32 %s191, 1
        %s1029 = smul.addr %s1028, 8
        %s1030 = scalar_lea.vmem [#allocation5], %s1029
        %s1031 = sand.u32 %s29, 1
        %s1032 = scalar_lea.sflag [#allocation7], %s1031
        %s1033 = sand.u32 %s219, 1
        %s1034 = smul.addr %s1033, 2
        %s1035 = scalar_lea.vmem [#allocation6], %s1034
        %s1036 = sand.u32 %s29, 1
        %s1037 = scalar_lea.sflag [#allocation7], %s1036
        %s1038 = sand.u32 %s247, 1
        %s1039 = smul.addr %s1038, 8
        %s1040 = scalar_lea.vmem [#allocation8], %s1039
        // Predicated region
        $region49: #{tpu_custom_call.1} parent=43 // pred_check
          %p1041 = pneg %p201
        $region50: #{tpu_custom_call.1} parent=43 // pred_check_branch
          %1043 = sbr.rel (%p1041) target = $region52
        $region51: #{tpu_custom_call.1} parent=43 // pred_region
          %s1044 = smul.u32 2, %s34
          %s1046 = ssub.s32 128, 128
          %1047 = vsyncadd %s1027, %s1046
          %s1048 = smul.addr %s33, 2
          %s1049 = sadd.s32 %s1044, %s1048
          %s1050 = smul.addr %s1049, 64
          %s1051 = scalar_lea.hbm %s6, %s1050
          %s1053 = sshll.u32 %s1030, 4
          %s1054 = int_to_ptr.vmem [resolvable:$true] %s1053
          %1056 = dma.vmem_to_hbm [thread:$0]  %s1054, 128, %s1051, %s1027
        $region52: #{tpu_custom_call.1} parent=43 // pred_fallthru
          _
        // Predicated region
        $region53: #{tpu_custom_call.1} parent=43 // pred_check
          %p1057 = pneg %p229
        $region54: #{tpu_custom_call.1} parent=43 // pred_check_branch
          %1059 = sbr.rel (%p1057) target = $region56
        $region55: #{tpu_custom_call.1} parent=43 // pred_region
          %s1060 = smul.u32 2, %s34
          %s1062 = ssub.s32 32, 32
          %1063 = vsyncadd %s1032, %s1062
          %s1064 = smul.addr %s33, 2
          %s1065 = sadd.s32 %s1060, %s1064
          %s1066 = smul.addr %s1065, 16
          %s1067 = scalar_lea.hbm %s7, %s1066
          %s1069 = sshll.u32 %s1035, 4
          %s1070 = int_to_ptr.vmem [resolvable:$true] %s1069
          %1072 = dma.vmem_to_hbm [thread:$0]  %s1070, 32, %s1067, %s1032
        $region56: #{tpu_custom_call.1} parent=43 // pred_fallthru
          _
        // Predicated region
        $region57: #{tpu_custom_call.1} parent=43 // pred_check
          %p1073 = pneg %p257
        $region58: #{tpu_custom_call.1} parent=43 // pred_check_branch
          %1075 = sbr.rel (%p1073) target = $region60
        $region59: #{tpu_custom_call.1} parent=43 // pred_region
          %s1077 = ssub.s32 128, 128
          %1078 = vsyncadd %s1037, %s1077
          %s1079 = sadd.s32 %s34, %s33
          %s1080 = smul.addr %s1079, 128
          %s1081 = scalar_lea.hbm %s8, %s1080
          %s1083 = sshll.u32 %s1040, 4
          %s1084 = int_to_ptr.vmem [resolvable:$true] %s1083
          %1086 = dma.vmem_to_hbm [thread:$0]  %s1084, 128, %s1081, %s1037
        $region60: #{tpu_custom_call.1} parent=43 // pred_fallthru
          _
      $region44: #{tpu_custom_call.1} parent=5 // pred_fallthru
        _
      %p1087 = scmp.le.s32.totalorder 2, %s24
      // Predicated region
      $region61: #{tpu_custom_call.1} parent=5 // pred_check
        %p1088 = pneg %p1087
      $region62: #{tpu_custom_call.1} parent=5 // pred_check_branch
        %1090 = sbr.rel (%p1088) target = $region64
      $region63: #{tpu_custom_call.1} parent=5 // pred_region
        %s1091 = ssub.s32 %s24, 2
        // Predicated region
        $region65: #{tpu_custom_call.1} parent=63 // pred_check
          %p1092 = pneg %p207
        $region66: #{tpu_custom_call.1} parent=63 // pred_check_branch
          %1094 = sbr.rel (%p1092) target = $region68
        $region67: #{tpu_custom_call.1} parent=63 // pred_region
          %s1095 = sand.u32 %s192, 1
          %s1096 = scalar_lea.sflag [#allocation4], %s1095
          %s1097 = sand.u32 %s192, 1
          %s1098 = smul.addr %s1097, 8
          %s1099 = scalar_lea.vmem [#allocation5], %s1098
          %1100 = dma.done %s1096, 128
        $region68: #{tpu_custom_call.1} parent=63 // pred_fallthru
          _
        // Predicated region
        $region69: #{tpu_custom_call.1} parent=63 // pred_check
          %p1101 = pneg %p235
        $region70: #{tpu_custom_call.1} parent=63 // pred_check_branch
          %1103 = sbr.rel (%p1101) target = $region72
        $region71: #{tpu_custom_call.1} parent=63 // pred_region
          %s1104 = sand.u32 %s30, 1
          %s1105 = scalar_lea.sflag [#allocation7], %s1104
          %s1106 = sand.u32 %s220, 1
          %s1107 = smul.addr %s1106, 2
          %s1108 = scalar_lea.vmem [#allocation6], %s1107
          %1109 = dma.done %s1105, 32
        $region72: #{tpu_custom_call.1} parent=63 // pred_fallthru
          _
        // Predicated region
        $region73: #{tpu_custom_call.1} parent=63 // pred_check
          %p1110 = pneg %p263
        $region74: #{tpu_custom_call.1} parent=63 // pred_check_branch
          %1112 = sbr.rel (%p1110) target = $region76
        $region75: #{tpu_custom_call.1} parent=63 // pred_region
          %s1113 = sand.u32 %s30, 1
          %s1114 = scalar_lea.sflag [#allocation7], %s1113
          %s1115 = sand.u32 %s248, 1
          %s1116 = smul.addr %s1115, 8
          %s1117 = scalar_lea.vmem [#allocation8], %s1116
          %1118 = dma.done %s1114, 128
        $region76: #{tpu_custom_call.1} parent=63 // pred_fallthru
          _
      $region64: #{tpu_custom_call.1} parent=5 // pred_fallthru
        _
    $region6: #{tpu_custom_call.1} parent=1 // loop_footer
      %s28 = sadd.s32 1, %s24
    $region7: #{tpu_custom_call.1} parent=1 // loop_footer_branch
      %23 = sbr.rel target = $region3
    $region8: #{tpu_custom_call.1} parent=1 // loop_exit
      _
    %1119 = vsyncpa [#allocation3], 1
    %s1120 = scalar_lea.sflag [#allocation3], 1
    %1121 = vsyncpa %s1120, 1
    %1122 = vsyncpa [#allocation4], 1
    %s1123 = scalar_lea.sflag [#allocation4], 1
    %1124 = vsyncpa %s1123, 1
    %1125 = vsyncpa [#allocation7], 1
    %s1126 = scalar_lea.sflag [#allocation7], 1
    %1127 = vsyncpa %s1126, 1

</llo_original>
